<compile_context>
chip_gen: v6e
topology: v6e:2x2x1
jax: 0.10.0
libtpu: 0.0.40
codegen_flags: <defaults>
</compile_context>

<pallas_src>
import functools

import jax
import jax.numpy as jnp
from jax import lax
from jax.experimental import pallas as pl
from jax.experimental.pallas import tpu as pltpu


def _round_up(x, m):
    return ((x + m - 1) // m) * m


def _gnn_kernel(dxT_ref, g_ref, params_ref, out_ref, *,
                layer_meta, batch_size, chunk, n_chunks):
    # Init the resident [1, 3, B] output accumulator on the first edge tile
    # of this parallel shard (grid axis 1 is the "arbitrary" reduction axis).
    @pl.when(pl.program_id(1) == 0)
    def _():
        out_ref[...] = jnp.zeros_like(out_ref)

    # Load the (tiny) packed radial-MLP params once per tile.
    n_layers = len(layer_meta)
    weights = []
    for (row_off, dout, din) in layer_meta:
        Wt = params_ref[row_off:row_off + dout, 0:din]         # [dout, din]
        b = params_ref[row_off:row_off + dout, din:din + 1]    # [dout, 1]
        weights.append((Wt, b))

    acc = jnp.zeros((3, batch_size), jnp.float32)

    # Lane-chunked inner loop: static slices of the VMEM tile (zero-cost ref
    # views) keep the [hidden, chunk] activation inside the vreg file instead
    # of spilling a full-tile [hidden, te] activation through VMEM.
    for c in range(n_chunks):
        lo, hi = c * chunk, (c + 1) * chunk
        dx = dxT_ref[:, lo:hi]                                  # [3, C] lane-dense
        g = g_ref[:, lo:hi]                                     # [1, C] int32 (-1 = dropped/padded)

        r = jnp.sqrt(jnp.sum(dx * dx, axis=0, keepdims=True))  # [1, C]
        # hoisted hatd * r  ==  dx * r/(r+eps)  (exact division, passes 1e-4 check)
        scaled_dx = dx * (r / (r + 1e-8))                       # [3, C]

        # Radial MLP of the LAST message-passing step (earlier steps are dead:
        # each step overwrites h and the message never reads h).
        act = r                                                 # [1, C]
        for li, ((row_off, dout, din), (Wt, b)) in enumerate(zip(layer_meta, weights)):
            if din == 1:
                act = Wt * act + b                              # outer product on VPU
            else:
                act = jnp.dot(Wt, act, preferred_element_type=jnp.float32) + b
            if li != n_layers - 1:
                act = jnp.maximum(act, 0.0)                     # ReLU

        a = act[0:1, :]                                         # [1, C]
        bb = act[1:2, :]                                        # [1, C]
        msg = a * dx + bb * scaled_dx                           # [3, C]

        if batch_size <= 8:
            # Small-B fast path: per-graph masked lane reductions (XLU slot);
            # skips the [B, C] onehot build and the tiny-output MXU matmul.
            cols = [jnp.sum(jnp.where(g == gi, msg, 0.0), axis=1, keepdims=True)
                    for gi in range(batch_size)]                # each [3, 1]
            acc = acc + jnp.concatenate(cols, axis=1)           # [3, B]
        else:
            rows = lax.broadcasted_iota(jnp.int32, (batch_size, chunk), 0)
            onehot = (g == rows).astype(jnp.float32)            # [B, C]
            acc = acc + lax.dot_general(
                msg, onehot, (((1,), (1,)), ((), ())),
                preferred_element_type=jnp.float32)             # [3, B]

    out_ref[...] += acc[jnp.newaxis]                            # [1, 3, B]


def gnn_forward(x, edge_index, edge_attr, batch, params, *,
                edge_tile=8192, chunk=512, num_parallel=2):
    """params: list (per message-passing step) of list of (W, b) per Linear."""
    num_nodes = x.shape[0]
    E = edge_attr.shape[0]
    batch_size = 1 if (batch is None or batch.size == 0) else int(batch.max()) + 1
    npg = max(num_nodes // batch_size, 1)

    # Only the last step contributes to the output (see header comment).
    last = params[-1]

    # Pack last step's transposed weights + biases into one contiguous array:
    # per-layer block [W.T | b] of shape [dout, din+1], rows padded to 8.
    max_cols = max(W.shape[0] for (W, _b) in last) + 1
    layer_meta = []
    blocks = []
    row_off = 0
    for (W, b) in last:
        din, dout = W.shape
        blk = jnp.concatenate(
            [W.T.astype(jnp.float32), b.reshape(dout, 1).astype(jnp.float32)],
            axis=1)
        blk = jnp.pad(blk, ((0, _round_up(dout, 8) - dout),
                            (0, max_cols - (din + 1))))
        blocks.append(blk)
        layer_meta.append((row_off, dout, din))
        row_off += _round_up(dout, 8)
    params_packed = jnp.concatenate(blocks, axis=0)             # [rows, max_cols]

    # --- tile sizing (te multiple of chunk, E_pad multiple of P*te) ---------
    E_min = _round_up(max(E, 1), 128)
    chunk = max(128, (min(chunk, E_min) // 128) * 128)
    te = _round_up(min(edge_tile, E_min), chunk)
    n_chunks = te // chunk
    P = max(1, int(num_parallel))                               # megacore split (v7x)
    E_pad = _round_up(E_min, P * te)
    n_tiles = E_pad // (P * te)

    # Lane-dense per-edge layouts.  Padded dx == 0 -> msg == 0; padded/invalid
    # graph id == -1 -> dropped by the pooling mask (double safety).
    dxT = jnp.zeros((3, E_pad), jnp.float32).at[:, :E].set(
        edge_attr.astype(jnp.float32).T)
    tgt = edge_index[1].astype(jnp.int32)
    valid = (tgt >= 0) & (tgt < num_nodes)
    g_e = jnp.where(valid, jnp.minimum(tgt // npg, batch_size - 1), -1)
    g_row = jnp.full((1, E_pad), -1, jnp.int32).at[0, :E].set(g_e)

    grid = (P, n_tiles)

    # Advisory cost estimate for XLA scheduling around the custom call.
    mlp_flops = sum(2 * W.shape[0] * W.shape[1] for (W, _b) in last)
    cost = pl.CostEstimate(
        flops=int(E_pad * (mlp_flops + 6 * batch_size + 16)),
        transcendentals=int(E_pad),
        bytes_accessed=int(4 * (dxT.size + g_row.size + params_packed.size
                                + P * 3 * batch_size)))

    kernel = functools.partial(
        _gnn_kernel,
        layer_meta=tuple(layer_meta),
        batch_size=batch_size,
        chunk=chunk,
        n_chunks=n_chunks)

    edge_block_index = lambda p, e: (0, p * n_tiles + e)

    out = pl.pallas_call(
        kernel,
        out_shape=jax.ShapeDtypeStruct((P, 3, batch_size), jnp.float32),
        grid=grid,
        in_specs=[
            pl.BlockSpec((3, te), edge_block_index),            # dx tile
            pl.BlockSpec((1, te), edge_block_index),            # graph-of-edge tile
            pl.BlockSpec(params_packed.shape, lambda p, e: (0, 0)),  # packed MLP params
        ],
        out_specs=pl.BlockSpec((1, 3, batch_size), lambda p, e: (p, 0, 0)),
        compiler_params=pltpu.CompilerParams(
            dimension_semantics=("parallel", "arbitrary")),
        cost_estimate=cost,
    )(dxT, g_row, params_packed)

    # Sum the per-core partials and return [B, 3].
    return out.sum(axis=0).T


def _ref_forward(x, edge_index, edge_attr, batch, params):
    """Pure-JAX reference mirroring the PyTorch forward (all steps)."""
    N = x.shape[0]
    B = 1 if (batch is None or batch.size == 0) else int(batch.max()) + 1
    dx = edge_attr.astype(jnp.float32)
    r = jnp.sqrt(jnp.sum(dx * dx, axis=-1, keepdims=True))
    hatd = dx / (r + 1e-8)
    tgt = edge_index[1]
    h = jnp.zeros((N, 3), jnp.float32)
    for step_params in params:
        act = r
        for li, (W, b) in enumerate(step_params):
            act = act @ W + b
            if li != len(step_params) - 1:
                act = jax.nn.relu(act)
        a, bb = act[:, 0:1], act[:, 1:2]
        msg = a * dx + bb * (hatd * r)
        h = jnp.zeros((N, 3), jnp.float32).at[tgt].add(msg)
    npg = max(N // B, 1)
    seg = jnp.minimum(jnp.arange(N) // npg, B - 1)
    return jnp.zeros((B, 3), jnp.float32).at[seg].add(h)


def init_params(key, radial_hidden_dims, message_passing_steps):
    dims = [1] + list(radial_hidden_dims) + [2]
    params = []
    for _ in range(message_passing_steps):
        step = []
        for d_in, d_out in zip(dims, dims[1:]):
            key, kw, kb = jax.random.split(key, 3)
            bound = 1.0 / (d_in ** 0.5)
            W = jax.random.uniform(kw, (d_in, d_out), jnp.float32, -bound, bound)
            b = jax.random.uniform(kb, (d_out,), jnp.float32, -bound, bound)
            step.append((W, b))
        params.append(step)
    return params


if __name__ == "__main__":
    # Small synthetic graph: 8 nodes, 16 edges, 2 graphs (4 nodes each).
    N, E, B = 8, 16, 2
    hidden_dim = 32                 # unused by the forward pass (as in PyTorch)
    message_passing_steps = 2
    radial_hidden_dims = [32]

    key = jax.random.PRNGKey(0)
    k_x, k_attr, k_src, k_tgt, k_p = jax.random.split(key, 5)

    x = jax.random.normal(k_x, (N, 4), jnp.float32)          # only shape[0] matters
    edge_attr = jax.random.normal(k_attr, (E, 3), jnp.float32)
    src = jax.random.randint(k_src, (E,), 0, N, jnp.int32)
    tgt = jax.random.randint(k_tgt, (E,), 0, N, jnp.int32)
    tgt = tgt.at[-1].set(N - 1)
    edge_index = jnp.stack([src, tgt], axis=0)
    batch = jnp.array([0, 0, 0, 0, 1, 1, 1, 1], jnp.int32)

    params = init_params(k_p, radial_hidden_dims, message_passing_steps)

    out = gnn_forward(x, edge_index, edge_attr, batch, params)
    out = jax.block_until_ready(out)

    ref = _ref_forward(x, edge_index, edge_attr, batch, params)
    assert out.shape == (B, 3), out.shape
    assert jnp.allclose(out, ref, atol=1e-4, rtol=1e-4), (out, ref)

    print("KERNEL_OK")
</pallas_src>

<mosaic_0001>
module attributes {stable_mosaic.version = 11 : i64} {
  func.func @_gnn_kernel(%arg0: i32, %arg1: i32, %arg2: memref<3x128xf32, #tpu.memory_space<vmem>>, %arg3: memref<1x128xi32, #tpu.memory_space<vmem>>, %arg4: memref<40x33xf32, #tpu.memory_space<vmem>>, %arg5: memref<1x3x2xf32, #tpu.memory_space<vmem>>) attributes {dimension_semantics = [#tpu.dimension_semantics<parallel>, #tpu.dimension_semantics<arbitrary>], iteration_bounds = array<i64: 2, 1>, scalar_prefetch = 0 : i64, scratch_operands = 0 : i64, tpu.core_type = #tpu.core_type<tc>, window_params = [{transform_indices = @transform_0, window_bounds = array<i64: 3, 128>}, {transform_indices = @transform_1, window_bounds = array<i64: 1, 128>}, {pipeline_mode = #tpu.pipeline_mode<synchronous>, transform_indices = @transform_2, window_bounds = array<i64: 40, 33>}, {transform_indices = @transform_3, window_bounds = array<i64: 1, 3, 2>}]} {
    %c0_i32 = arith.constant 0 : i32
    %0 = arith.cmpi eq, %arg1, %c0_i32 : i32
    %1 = arith.extui %0 : i1 to i32
    %c0_i32_0 = arith.constant 0 : i32
    %2 = arith.cmpi ne, %1, %c0_i32_0 : i32
    scf.if %2 {
      %cst_25 = arith.constant 0.000000e+00 : f32
      %58 = vector.broadcast %cst_25 : f32 to vector<1x3x2xf32>
      %c0_26 = arith.constant 0 : index
      %c0_27 = arith.constant 0 : index
      %c0_28 = arith.constant 0 : index
      %59 = vector.load %arg5[%c0_26, %c0_27, %c0_28] : memref<1x3x2xf32, #tpu.memory_space<vmem>>, vector<1x3x2xf32>
      tpu.vector_store %arg5[%c0_26, %c0_27, %c0_28], %58 {strides = array<i32>} : memref<1x3x2xf32, #tpu.memory_space<vmem>>, vector<1x3x2xf32>,
    } else {
    }
    %c0 = arith.constant 0 : index
    %c0_1 = arith.constant 0 : index
    %3 = vector.load %arg4[%c0, %c0_1] : memref<40x33xf32, #tpu.memory_space<vmem>>, vector<32x1xf32>
    %c0_2 = arith.constant 0 : index
    %c1 = arith.constant 1 : index
    %4 = vector.load %arg4[%c0_2, %c1] : memref<40x33xf32, #tpu.memory_space<vmem>>, vector<32x1xf32>
    %c32 = arith.constant 32 : index
    %c0_3 = arith.constant 0 : index
    %5 = vector.load %arg4[%c32, %c0_3] : memref<40x33xf32, #tpu.memory_space<vmem>>, vector<2x32xf32>
    %c32_4 = arith.constant 32 : index
    %c32_5 = arith.constant 32 : index
    %6 = vector.load %arg4[%c32_4, %c32_5] : memref<40x33xf32, #tpu.memory_space<vmem>>, vector<2x1xf32>
    %cst = arith.constant 0.000000e+00 : f32
    %7 = vector.broadcast %cst : f32 to vector<3x2xf32>
    %c0_6 = arith.constant 0 : index
    %c0_7 = arith.constant 0 : index
    %8 = vector.load %arg2[%c0_6, %c0_7] : memref<3x128xf32, #tpu.memory_space<vmem>>, vector<3x128xf32>
    %c0_8 = arith.constant 0 : index
    %c0_9 = arith.constant 0 : index
    %9 = vector.load %arg3[%c0_8, %c0_9] : memref<1x128xi32, #tpu.memory_space<vmem>>, vector<1x128xi32>
    %10 = arith.mulf %8, %8 : vector<3x128xf32>
    %cst_10 = arith.constant dense<0.000000e+00> : vector<128xf32>
    %11 = vector.multi_reduction <add>, %10, %cst_10 [0] : vector<3x128xf32> to vector<128xf32>
    %12 = vector.shape_cast %11 : vector<128xf32> to vector<1x128xf32>
    %13 = math.sqrt %12 : vector<1x128xf32>
    %cst_11 = arith.constant 9.99999993E-9 : f32
    %14 = vector.broadcast %cst_11 : f32 to vector<1x128xf32>
    %15 = arith.addf %13, %14 : vector<1x128xf32>
    %16 = arith.divf %13, %15 : vector<1x128xf32>
    %17 = vector.broadcast %16 : vector<1x128xf32> to vector<3x128xf32>
    %18 = arith.mulf %8, %17 : vector<3x128xf32>
    %19 = vector.broadcast %3 : vector<32x1xf32> to vector<32x128xf32>
    %20 = vector.broadcast %13 : vector<1x128xf32> to vector<32x128xf32>
    %21 = arith.mulf %19, %20 : vector<32x128xf32>
    %22 = vector.broadcast %4 : vector<32x1xf32> to vector<32x128xf32>
    %23 = arith.addf %21, %22 : vector<32x128xf32>
    %cst_12 = arith.constant 0.000000e+00 : f32
    %24 = vector.broadcast %cst_12 : f32 to vector<32x128xf32>
    %25 = arith.maximumf %23, %24 : vector<32x128xf32>
    %cst_13 = arith.constant dense<0.000000e+00> : vector<2x128xf32>
    %26 = tpu.matmul %5, %25, %cst_13 {dimension_numbers = #tpu.dot_dimension_numbers<[1], [0], [0], [1], [0, 0, 1, 1], [], []>} : vector<2x32xf32>, vector<32x128xf32>, vector<2x128xf32> -> vector<2x128xf32>
    %27 = vector.broadcast %6 : vector<2x1xf32> to vector<2x128xf32>
    %28 = arith.addf %26, %27 : vector<2x128xf32>
    %29 = vector.extract_strided_slice %28 {offsets = [0, 0], sizes = [1, 128], strides = [1, 1]} : vector<2x128xf32> to vector<1x128xf32>
    %30 = vector.extract_strided_slice %28 {offsets = [1, 0], sizes = [1, 128], strides = [1, 1]} : vector<2x128xf32> to vector<1x128xf32>
    %31 = vector.broadcast %29 : vector<1x128xf32> to vector<3x128xf32>
    %32 = arith.mulf %31, %8 : vector<3x128xf32>
    %33 = vector.broadcast %30 : vector<1x128xf32> to vector<3x128xf32>
    %34 = arith.mulf %33, %18 : vector<3x128xf32>
    %35 = arith.addf %32, %34 : vector<3x128xf32>
    %c0_i32_14 = arith.constant 0 : i32
    %36 = vector.broadcast %c0_i32_14 : i32 to vector<1x128xi32>
    %37 = arith.cmpi eq, %9, %36 : vector<1x128xi32>
    %cst_15 = arith.constant 0.000000e+00 : f32
    %38 = vector.shape_cast %37 : vector<1x128xi1> to vector<1x128xi1>
    %39 = vector.broadcast %38 : vector<1x128xi1> to vector<3x128xi1>
    %40 = vector.broadcast %cst_15 : f32 to vector<3x128xf32>
    %41 = arith.select %39, %35, %40 : vector<3x128xi1>, vector<3x128xf32>
    %cst_16 = arith.constant dense<0.000000e+00> : vector<3xf32>
    %42 = vector.multi_reduction <add>, %41, %cst_16 [1] : vector<3x128xf32> to vector<3xf32>
    %43 = vector.shape_cast %42 : vector<3xf32> to vector<3x1xf32>
    %c1_i32 = arith.constant 1 : i32
    %44 = vector.broadcast %c1_i32 : i32 to vector<1x128xi32>
    %45 = arith.cmpi eq, %9, %44 : vector<1x128xi32>
    %cst_17 = arith.constant 0.000000e+00 : f32
    %46 = vector.shape_cast %45 : vector<1x128xi1> to vector<1x128xi1>
    %47 = vector.broadcast %46 : vector<1x128xi1> to vector<3x128xi1>
    %48 = vector.broadcast %cst_17 : f32 to vector<3x128xf32>
    %49 = arith.select %47, %35, %48 : vector<3x128xi1>, vector<3x128xf32>
    %cst_18 = arith.constant dense<0.000000e+00> : vector<3xf32>
    %50 = vector.multi_reduction <add>, %49, %cst_18 [1] : vector<3x128xf32> to vector<3xf32>
    %51 = vector.shape_cast %50 : vector<3xf32> to vector<3x1xf32>
    %52 = tpu.concatenate %43, %51 in 1 : vector<3x1xf32>, vector<3x1xf32> -> vector<3x2xf32>
    %53 = arith.addf %7, %52 : vector<3x2xf32>
    %c0_19 = arith.constant 0 : index
    %c0_20 = arith.constant 0 : index
    %c0_21 = arith.constant 0 : index
    %54 = vector.load %arg5[%c0_19, %c0_20, %c0_21] : memref<1x3x2xf32, #tpu.memory_space<vmem>>, vector<1x3x2xf32>
    %55 = vector.shape_cast %53 : vector<3x2xf32> to vector<1x3x2xf32>
    %56 = arith.addf %54, %55 : vector<1x3x2xf32>
    %c0_22 = arith.constant 0 : index
    %c0_23 = arith.constant 0 : index
    %c0_24 = arith.constant 0 : index
    %57 = vector.load %arg5[%c0_22, %c0_23, %c0_24] : memref<1x3x2xf32, #tpu.memory_space<vmem>>, vector<1x3x2xf32>
    tpu.vector_store %arg5[%c0_22, %c0_23, %c0_24], %56 {strides = array<i32>} : memref<1x3x2xf32, #tpu.memory_space<vmem>>, vector<1x3x2xf32>,
    return
  }
  func.func @transform_0(%arg0: i32, %arg1: i32) -> (i32, i32) {
    %c1_i32 = arith.constant 1 : i32
    %0 = arith.muli %arg0, %c1_i32 : i32
    %1 = arith.addi %0, %arg1 : i32
    %c0_i32 = arith.constant 0 : i32
    %c0_i32_0 = arith.constant 0 : i32
    return %c0_i32, %1 : i32, i32
  }
  func.func @transform_1(%arg0: i32, %arg1: i32) -> (i32, i32) {
    %c1_i32 = arith.constant 1 : i32
    %0 = arith.muli %arg0, %c1_i32 : i32
    %1 = arith.addi %0, %arg1 : i32
    %c0_i32 = arith.constant 0 : i32
    %c0_i32_0 = arith.constant 0 : i32
    return %c0_i32, %1 : i32, i32
  }
  func.func @transform_2(%arg0: i32, %arg1: i32) -> (i32, i32) {
    %c0_i32 = arith.constant 0 : i32
    %c0_i32_0 = arith.constant 0 : i32
    %c0_i32_1 = arith.constant 0 : i32
    return %c0_i32, %c0_i32_0 : i32, i32
  }
  func.func @transform_3(%arg0: i32, %arg1: i32) -> (i32, i32, i32) {
    %c0_i32 = arith.constant 0 : i32
    %c0_i32_0 = arith.constant 0 : i32
    %c0_i32_1 = arith.constant 0 : i32
    return %arg0, %c0_i32, %c0_i32_0 : i32, i32, i32
  }
}

</mosaic_0001>

<llo_original>
// kernel: tpu_custom_call.1
$region0: #{tpu_custom_call.1}
  #allocation0 [shape = 'u32[]', space=smem, size = 0x4, offset = 0x4, fixed_abs, tag = 'smem constant byte address 0x4 - core index']
  #allocation1 [shape = 'u32[144,128]{1,0:T(1,128)}', space=vmem, size = 0x12000, scoped, tag = 'internal scratch']
  %s0 = inlined_call_operand.hbm [shape: f32[3,256], index: 0, kind: input, shape index: {}]
  %s1 = inlined_call_operand.hbm [shape: s32[1,256], index: 1, kind: input, shape index: {}]
  %s2 = inlined_call_operand.hbm [shape: f32[40,33], index: 2, kind: input, shape index: {}]
  %s3 = inlined_call_operand.vmem [shape: f32[2,3,2], index: 3, kind: output, shape index: {}]
  %s4 = sld [smem:[#allocation0]]
  $region61: #{tpu_custom_call.1} parent=0
    _
  %s6 = ssub.s32 1, %s4
  %s7 = scalar_select 0, %s6, %s4
  $region1: #{tpu_custom_call.1} parent=0
    #allocation2 [shape = 'u8[4096]{0}', space=vmem, size = 0x1000, scoped, tag = 'input window, operand 0']
    #allocation3 [shape = 's32[2]{0}', space=sflag, size = 0x8, scoped, tag = 'scoped memory for tpu_custom_call.1']
    #allocation4 [shape = 'u8[1024]{0}', space=vmem, size = 0x400, scoped, tag = 'input window, operand 1']
    #allocation5 [shape = 's32[2]{0}', space=sflag, size = 0x8, scoped, tag = 'scoped memory for tpu_custom_call.1']
    #allocation6 [shape = 'u8[20480]{0}', space=vmem, size = 0x5000, scoped, tag = 'input window, operand 2, single buffered']
    %8 = vsyncpa [#allocation3], 0
    %s9 = scalar_lea.sflag [#allocation3], 1
    %10 = vsyncpa %s9, 0
    %11 = vsyncpa [#allocation5], 0
    %s12 = scalar_lea.sflag [#allocation5], 1
    %13 = vsyncpa %s12, 0
    loop: start=0, step=1, limit=4
    $region2: #{tpu_custom_call.1} parent=1 // loop_pre_header
      _
    $region3: #{tpu_custom_call.1} parent=1 // loop_header
      %s15 = sphi 0, %s19
      %p16 = scmp.ge.s32.totalorder %s15, 4
      %s22 = sphi 0, %s34
      %s23 = sphi 0, %s30
      %s24 = sphi 0, %s22
      %s25 = sphi 0, %s23
      %s26 = sphi 0, %s24
      %s27 = sphi 0, %s25
      %s39 = sphi 0, %s41
      %s42 = sphi 0, %s39
      %s43 = sphi 0, %s42
      %s59 = sphi 0, %s43
      %s67 = sphi 0, %s69
      %s70 = sphi 0, %s67
      %s71 = sphi 0, %s70
      %s87 = sphi 0, %s71
      %s91 = sphi 0, %s91
      %s93 = sphi 0, %s91
      %s94 = sphi 0, %s93
      %s108 = sphi 0, %s94
      %s114 = sphi 0, %s116
      %s117 = sphi 0, %s114
      %s118 = sphi 0, %s117
      %s134 = sphi 0, %s118
    $region4: #{tpu_custom_call.1} parent=1 // loop_header_branch
      %18 = sbr.rel (%p16) target = $region8
    $region5: #{tpu_custom_call.1} parent=1 // loop_body
      %s20 = ssub.s32 %s15, 1
      %s21 = ssub.s32 %s15, 2
      %s28 = sadd.s32 1, %s23
      %p29 = scmp.ge.s32.totalorder %s28, 1
      %s30 = scalar_select %p29, 0, %s28
      %s31 = sadd.s32 1, %s22
      %s32 = scalar_select %p29, %s31, %s22
      %p33 = scmp.ge.s32.totalorder %s32, 2
      %s34 = scalar_select %p33, 0, %s32
      %s35 = sadd.s32 %s22, %s23
      %s36 = sadd.s32 %s34, %s30
      %s37 = ssub.s32 %s35, %s36
      %p38 = scmp.eq.s32.totalorder %s37, 0
      %s40 = sadd.s32 %s39, 1
      %s41 = scalar_select %p38, %s39, %s40
      %p44 = pneg %p38
      %p45 = scmp.eq.s32.totalorder %s15, 1
      %p46 = por %p44, %p45
      %p47 = scmp.ne.s32.totalorder %s39, %s42
      %p48 = scmp.eq.s32.totalorder %s15, 0
      %p49 = por %p47, %p48
      %p50 = scmp.ne.s32.totalorder %s39, %s42
      %p51 = scmp.eq.s32.totalorder %s20, 1
      %p52 = por %p50, %p51
      %p53 = scmp.ne.s32.totalorder %s42, %s43
      %p54 = scmp.eq.s32.totalorder %s20, 0
      %p55 = por %p53, %p54
      %p56 = scmp.ne.s32.totalorder %s42, %s43
      %p57 = scmp.eq.s32.totalorder %s21, 1
      %p58 = por %p56, %p57
      %p60 = scmp.ne.s32.totalorder %s43, %s59
      %p61 = scmp.eq.s32.totalorder %s21, 0
      %p62 = por %p60, %p61
      %s63 = sadd.s32 %s22, %s23
      %s64 = sadd.s32 %s34, %s30
      %s65 = ssub.s32 %s63, %s64
      %p66 = scmp.eq.s32.totalorder %s65, 0
      %s68 = sadd.s32 %s67, 1
      %s69 = scalar_select %p66, %s67, %s68
      %p72 = pneg %p66
      %p73 = scmp.eq.s32.totalorder %s15, 1
      %p74 = por %p72, %p73
      %p75 = scmp.ne.s32.totalorder %s67, %s70
      %p76 = scmp.eq.s32.totalorder %s15, 0
      %p77 = por %p75, %p76
      %p78 = scmp.ne.s32.totalorder %s67, %s70
      %p79 = scmp.eq.s32.totalorder %s20, 1
      %p80 = por %p78, %p79
      %p81 = scmp.ne.s32.totalorder %s70, %s71
      %p82 = scmp.eq.s32.totalorder %s20, 0
      %p83 = por %p81, %p82
      %p84 = scmp.ne.s32.totalorder %s70, %s71
      %p85 = scmp.eq.s32.totalorder %s21, 1
      %p86 = por %p84, %p85
      %p88 = scmp.ne.s32.totalorder %s71, %s87
      %p89 = scmp.eq.s32.totalorder %s21, 0
      %p90 = por %p88, %p89
      %s92 = sadd.s32 %s91, 1
      %p95 = scmp.eq.s32.totalorder %s15, 1
      %p96 = scmp.ne.s32.totalorder %s91, %s93
      %p97 = scmp.eq.s32.totalorder %s15, 0
      %p98 = por %p96, %p97
      %p99 = scmp.ne.s32.totalorder %s91, %s93
      %p100 = scmp.eq.s32.totalorder %s20, 1
      %p101 = por %p99, %p100
      %p102 = scmp.ne.s32.totalorder %s93, %s94
      %p103 = scmp.eq.s32.totalorder %s20, 0
      %p104 = por %p102, %p103
      %p105 = scmp.ne.s32.totalorder %s93, %s94
      %p106 = scmp.eq.s32.totalorder %s21, 1
      %p107 = por %p105, %p106
      %p109 = scmp.ne.s32.totalorder %s94, %s108
      %p110 = scmp.eq.s32.totalorder %s21, 0
      %p111 = por %p109, %p110
      %s112 = ssub.s32 %s22, %s34
      %p113 = scmp.eq.s32.totalorder %s112, 0
      %s115 = sadd.s32 %s114, 1
      %s116 = scalar_select %p113, %s114, %s115
      %p119 = pneg %p113
      %p120 = scmp.eq.s32.totalorder %s15, 1
      %p121 = por %p119, %p120
      %p122 = scmp.ne.s32.totalorder %s114, %s117
      %p123 = scmp.eq.s32.totalorder %s15, 0
      %p124 = por %p122, %p123
      %p125 = scmp.ne.s32.totalorder %s114, %s117
      %p126 = scmp.eq.s32.totalorder %s20, 1
      %p127 = por %p125, %p126
      %p128 = scmp.ne.s32.totalorder %s117, %s118
      %p129 = scmp.eq.s32.totalorder %s20, 0
      %p130 = por %p128, %p129
      %p131 = scmp.ne.s32.totalorder %s117, %s118
      %p132 = scmp.eq.s32.totalorder %s21, 1
      %p133 = por %p131, %p132
      %p135 = scmp.ne.s32.totalorder %s118, %s134
      %p136 = scmp.eq.s32.totalorder %s21, 0
      %p137 = por %p135, %p136
      %p138 = scmp.le.s32.totalorder 1, %s15
      %p139 = scmp.lt.s32.totalorder %s15, 3
      %p140 = pnand %p138, %p139
      %p141 = pneg %p140
      // Predicated region
      $region9: #{tpu_custom_call.1} parent=5 // pred_check
        _
      $region10: #{tpu_custom_call.1} parent=5 // pred_check_branch
        %143 = sbr.rel (%p140) target = $region12
      $region11: #{tpu_custom_call.1} parent=5 // pred_region
        %s144 = ssub.s32 %s15, 1
        // Predicated region
        $region13: #{tpu_custom_call.1} parent=11 // pred_check
          %p145 = pneg %p104
        $region14: #{tpu_custom_call.1} parent=11 // pred_check_branch
          %147 = sbr.rel (%p145) target = $region16
        $region15: #{tpu_custom_call.1} parent=11 // pred_region
          %s149 = ssub.s32 640, 640
          %150 = vsyncadd [#allocation5], %s149
          %s151 = sshll.u32 [#allocation6], 4
          %s152 = int_to_ptr.vmem [resolvable:$true] %s151
          %157 = dma.hbm_to_vmem [thread:$0]  %s2, 640, %s152, [#allocation5], 128, 128, 8
        $region16: #{tpu_custom_call.1} parent=11 // pred_fallthru
          _
      $region12: #{tpu_custom_call.1} parent=5 // pred_fallthru
        _
      %p158 = scmp.lt.s32.totalorder %s15, 2
      // Predicated region
      $region17: #{tpu_custom_call.1} parent=5 // pred_check
        %p159 = pneg %p158
      $region18: #{tpu_custom_call.1} parent=5 // pred_check_branch
        %161 = sbr.rel (%p159) target = $region20
      $region19: #{tpu_custom_call.1} parent=5 // pred_region
        // Predicated region
        $region21: #{tpu_custom_call.1} parent=19 // pred_check
          %p162 = pneg %p49
        $region22: #{tpu_custom_call.1} parent=19 // pred_check_branch
          %164 = sbr.rel (%p162) target = $region24
        $region23: #{tpu_custom_call.1} parent=19 // pred_region
          %s165 = sand.u32 %s39, 1
          %s166 = scalar_lea.sflag [#allocation3], %s165
          %s167 = sand.u32 %s39, 1
          %s168 = smul.addr %s167, 4
          %s169 = scalar_lea.vmem [#allocation2], %s168
          %s170 = sadd.s32 %s22, %s23
          %s172 = ssub.s32 64, 64
          %173 = vsyncadd %s166, %s172
          %s174 = smul.addr %s170, 64
          %s175 = scalar_lea.hbm %s0, %s174
          %s177 = sshll.u32 %s169, 4
          %s178 = int_to_ptr.vmem [resolvable:$true] %s177
          %180 = dma.hbm_to_vmem [thread:$0]  %s175, 64, %s178, %s166
        $region24: #{tpu_custom_call.1} parent=19 // pred_fallthru
          _
        // Predicated region
        $region25: #{tpu_custom_call.1} parent=19 // pred_check
          %p181 = pneg %p77
        $region26: #{tpu_custom_call.1} parent=19 // pred_check_branch
          %183 = sbr.rel (%p181) target = $region28
        $region27: #{tpu_custom_call.1} parent=19 // pred_region
          %s184 = sand.u32 %s15, 1
          %s185 = scalar_lea.sflag [#allocation5], %s184
          %s186 = sand.u32 %s67, 1
          %s187 = scalar_lea.vmem [#allocation4], %s186
          %s188 = sadd.s32 %s22, %s23
          %s190 = ssub.s32 16, 16
          %191 = vsyncadd %s185, %s190
          %s192 = smul.addr %s188, 16
          %s193 = scalar_lea.hbm %s1, %s192
          %s195 = sshll.u32 %s187, 4
          %s196 = int_to_ptr.vmem [resolvable:$true] %s195
          %198 = dma.hbm_to_vmem [thread:$0]  %s193, 16, %s196, %s185
        $region28: #{tpu_custom_call.1} parent=19 // pred_fallthru
          _
      $region20: #{tpu_custom_call.1} parent=5 // pred_fallthru
        _
      %p199 = scmp.le.s32.totalorder 1, %s15
      %p200 = scmp.lt.s32.totalorder %s15, 3
      %p201 = pnand %p199, %p200
      %p202 = pneg %p201
      // Predicated region
      $region29: #{tpu_custom_call.1} parent=5 // pred_check
        _
      $region30: #{tpu_custom_call.1} parent=5 // pred_check_branch
        %204 = sbr.rel (%p201) target = $region32
      $region31: #{tpu_custom_call.1} parent=5 // pred_region
        %s205 = ssub.s32 %s15, 1
        %s206 = sand.u32 %s42, 1
        %s207 = scalar_lea.sflag [#allocation3], %s206
        %s208 = sand.u32 %s42, 1
        %s209 = smul.addr %s208, 4
        %s210 = scalar_lea.vmem [#allocation2], %s209
        // Predicated region
        $region33: #{tpu_custom_call.1} parent=31 // pred_check
          %p211 = pneg %p55
        $region34: #{tpu_custom_call.1} parent=31 // pred_check_branch
          %213 = sbr.rel (%p211) target = $region36
        $region35: #{tpu_custom_call.1} parent=31 // pred_region
          %214 = dma.done %s207, 64
        $region36: #{tpu_custom_call.1} parent=31 // pred_fallthru
          _
        %s215 = sand.u32 %s20, 1
        %s216 = scalar_lea.sflag [#allocation5], %s215
        %s217 = sand.u32 %s70, 1
        %s218 = scalar_lea.vmem [#allocation4], %s217
        // Predicated region
        $region37: #{tpu_custom_call.1} parent=31 // pred_check
          %p219 = pneg %p83
        $region38: #{tpu_custom_call.1} parent=31 // pred_check_branch
          %221 = sbr.rel (%p219) target = $region40
        $region39: #{tpu_custom_call.1} parent=31 // pred_region
          %222 = dma.done %s216, 16
        $region40: #{tpu_custom_call.1} parent=31 // pred_fallthru
          _
        // Predicated region
        $region41: #{tpu_custom_call.1} parent=31 // pred_check
          %p223 = pneg %p104
        $region42: #{tpu_custom_call.1} parent=31 // pred_check_branch
          %225 = sbr.rel (%p223) target = $region44
        $region43: #{tpu_custom_call.1} parent=31 // pred_region
          %226 = dma.done [#allocation5], 640
        $region44: #{tpu_custom_call.1} parent=31 // pred_fallthru
          _
        %s227 = sand.u32 %s42, 1
        %s228 = scalar_lea.sflag [#allocation3], %s227
        %s229 = sand.u32 %s42, 1
        %s230 = smul.addr %s229, 4
        %s231 = scalar_lea.vmem [#allocation2], %s230
        %p232 = pneg %p55
        %p233 = pneg %p52
        %s234 = sand.u32 %s20, 1
        %s235 = scalar_lea.sflag [#allocation5], %s234
        %s236 = sand.u32 %s70, 1
        %s237 = scalar_lea.vmem [#allocation4], %s236
        %p238 = pneg %p83
        %p239 = pneg %p80
        %p240 = pneg %p104
        %p241 = pneg %p101
        %p242 = pneg %p130
        %p243 = pneg %p127
        %p244 = scmp.lt.s32.totalorder %s24, 1
        %s245 = scalar_select %p244, %s24, 1
        %s246 = smul.addr %s245, 4
        %s247 = scalar_lea.vmem %s3, %s246
        %s248 = sadd.s32 %s24, %s25
        %s249 = sadd.s32 %s24, %s25
        %p250 = scmp.lt.s32.totalorder %s24, 1
        %s251 = scalar_select %p250, %s24, 1
        %s252 = smul.addr %s251, 4
        %s253 = scalar_lea.vmem %s3, %s252
        %p254 = scmp.eq.s32.totalorder %s25, 0
        // Predicated region
        $region45: #{tpu_custom_call.1} parent=31 // pred_check
          %p255 = pneg %p254
        $region46: #{tpu_custom_call.1} parent=31 // pred_check_branch
          %257 = sbr.rel (%p255) target = $region48
        $region47: #{tpu_custom_call.1} parent=31 // pred_region
          %vm258 = vcmask 10240
          %259 = vst.msk [vmem:[%s253] sm:$0x7] %vm258, 0.0
        $region48: #{tpu_custom_call.1} parent=31 // pred_fallthru
          _
        %v260 = vld [vmem:[#allocation6] sm:$0xff]
        %v261 = vld [vmem:[#allocation6 + $0x8] sm:$0xff]
        %v262 = vld [vmem:[#allocation6 + $0x10] sm:$0xff]
        %v263 = vld [vmem:[#allocation6 + $0x18] sm:$0xff]
        %v264 = vld [vmem:[#allocation6 + $0x20] sm:$0x3]
        %v265 = vld [vmem:[%s210] sm:$0x7]
        %v266 = vld [vmem:[%s218] sm:$0x1]
        %v267 = vmul.f32 %v265, %v265
        %vm268 = vcmask 1042432
        %v269 = vsel %vm268, %v267, 0.0
        %v270 = vrot.slane %v269, 4
        %v271 = vadd.f32 %v269, %v270
        %v272 = vrot.slane %v271, 2
        %v273 = vadd.f32 %v271, %v272
        %v274 = vrot.slane %v273, 1
        %v275 = vadd.f32 %v273, %v274
        %v276 = vrsqrt.pop %v275
        %v277 = vmul.f32 %v275, %v276
        %vm278 = vcmp.eq.f32.partialorder %v275, inf
        %v279 = vsel %vm278, %v275, %v277
        %vm280 = vcmp.eq.f32.partialorder %v275, 0.0
        %v281 = vand.u32 %v275, 2147483648
        %v282 = vsel %vm280, %v281, %v279
        %v283 = vadd.f32 %v282, 1e-08
        %v284 = vrcp.pop %v283
        %v285 = vmul.f32 %v282, %v284
        %v286 = vmul.f32 %v265, %v285
        %288 = vset.pattern.permute.xlu0 0
        %289 = vperm.xlu0 %288, %v260
        %v290 = vpop.permute.xlu0 %289
        %293 = vset.pattern.permute.xlu0 0
        %294 = vperm.xlu0 %293, %v261
        %v295 = vpop.permute.xlu0 %294
        %298 = vset.pattern.permute.xlu0 0
        %299 = vperm.xlu0 %298, %v262
        %v300 = vpop.permute.xlu0 %299
        %303 = vset.pattern.permute.xlu0 0
        %304 = vperm.xlu0 %303, %v263
        %v305 = vpop.permute.xlu0 %304
        %v307 = vmul.f32 %v290, %v282
        %v308 = vmul.f32 %v295, %v282
        %v309 = vmul.f32 %v300, %v282
        %v310 = vmul.f32 %v305, %v282
        %311 = vset.pattern.permute.xlu0 1
        %312 = vperm.xlu0 %311, %v260
        %v313 = vpop.permute.xlu0 %312
        %315 = vset.pattern.permute.xlu0 1
        %316 = vperm.xlu0 %315, %v261
        %v317 = vpop.permute.xlu0 %316
        %319 = vset.pattern.permute.xlu0 1
        %320 = vperm.xlu0 %319, %v262
        %v321 = vpop.permute.xlu0 %320
        %323 = vset.pattern.permute.xlu0 1
        %324 = vperm.xlu0 %323, %v263
        %v325 = vpop.permute.xlu0 %324
        %v327 = vadd.f32 %v307, %v313
        %v328 = vadd.f32 %v308, %v317
        %v329 = vadd.f32 %v309, %v321
        %v330 = vadd.f32 %v310, %v325
        %v331 = vmax.f32 %v327, 0.0
        %v332 = vmax.f32 %v328, 0.0
        %v333 = vmax.f32 %v329, 0.0
        %v334 = vmax.f32 %v330, 0.0
        %336 = vset.pattern.permute.xlu0 32
        %337 = vperm.xlu0 %336, %v264
        %v338 = vpop.permute.xlu0 %337
        %vm340 = vcmask 261120
        %v341 = vsel %vm340, %v264, 0
        %343 = vmatprep.subr.mxu0 0.0
        %344 = vmatpush1.msra.mxu0 0.0
        %345 = vmatprep.subr.mxu0 0.0
        %346 = vmatpush1.msra.mxu0 0.0
        %347 = vmatprep.subr.mxu0 0.0
        %348 = vmatpush1.msra.mxu0 0.0
        %349 = vmatprep.subr.mxu0 0.0
        %350 = vmatpush1.msra.mxu0 0.0
        %351 = vmatprep.subr.mxu0 0.0
        %352 = vmatpush1.msra.mxu0 0.0
        %353 = vmatprep.subr.mxu0 0.0
        %354 = vmatpush1.msra.mxu0 0.0
        %355 = vmatprep.subr.mxu0 0.0
        %356 = vmatpush1.msra.mxu0 0.0
        %357 = vmatprep.subr.mxu0 0.0
        %358 = vmatpush1.msra.mxu0 0.0
        %359 = vmatprep.subr.mxu0 0.0
        %360 = vmatpush1.msra.mxu0 0.0
        %361 = vmatprep.subr.mxu0 0.0
        %362 = vmatpush1.msra.mxu0 0.0
        %363 = vmatprep.subr.mxu0 0.0
        %364 = vmatpush1.msra.mxu0 0.0
        %365 = vmatprep.subr.mxu0 0.0
        %366 = vmatpush1.msra.mxu0 0.0
        %367 = vmatprep.subr.mxu0 0.0
        %368 = vmatpush1.msra.mxu0 %v334
        %369 = vmatprep.subr.mxu0 0.0
        %370 = vmatpush1.msra.mxu0 %v333
        %371 = vmatprep.subr.mxu0 0.0
        %372 = vmatpush1.msra.mxu0 %v332
        %373 = vmatprep.subr.mxu0 0.0
        %374 = vmatpush1.msra.mxu0 %v331
        %375 = vmatprep.subr.mxu0 0.0
        %376 = vmatpush2.msra.mxu0 0.0
        %377 = vmatprep.subr.mxu0 0.0
        %378 = vmatpush2.msra.mxu0 0.0
        %379 = vmatprep.subr.mxu0 0.0
        %380 = vmatpush2.msra.mxu0 0.0
        %381 = vmatprep.subr.mxu0 0.0
        %382 = vmatpush2.msra.mxu0 0.0
        %383 = vmatprep.subr.mxu0 0.0
        %384 = vmatpush2.msra.mxu0 0.0
        %385 = vmatprep.subr.mxu0 0.0
        %386 = vmatpush2.msra.mxu0 0.0
        %387 = vmatprep.subr.mxu0 0.0
        %388 = vmatpush2.msra.mxu0 0.0
        %389 = vmatprep.subr.mxu0 0.0
        %390 = vmatpush2.msra.mxu0 0.0
        %391 = vmatprep.subr.mxu0 0.0
        %392 = vmatpush2.msra.mxu0 0.0
        %393 = vmatprep.subr.mxu0 0.0
        %394 = vmatpush2.msra.mxu0 0.0
        %395 = vmatprep.subr.mxu0 0.0
        %396 = vmatpush2.msra.mxu0 0.0
        %397 = vmatprep.subr.mxu0 0.0
        %398 = vmatpush2.msra.mxu0 0.0
        %399 = vmatprep.subr.mxu0 0.0
        %400 = vmatpush2.msra.mxu0 0.0
        %401 = vmatprep.subr.mxu0 0.0
        %402 = vmatpush2.msra.mxu0 0.0
        %403 = vmatprep.subr.mxu0 0.0
        %404 = vmatpush2.msra.mxu0 0.0
        %405 = vmatprep.subr.mxu0 0.0
        %406 = vmatpush2.msra.mxu0 0.0
        %407 = vmatprep.mubr.f32.mxu0 0.0
        %408 = vmatmul.mubr.f32.gmra.mxu0 %v341
        %v409 = vpop.f32.mrf.mxu0
        %v410 = vadd.f32 %v338, %v409
        %v411 = vpop.f32.mrf.mxu0
        %412 = vdwg.mxu0
        %v413 = vlaneseq
        %v414 = vshrl.u32 %v413, 7
        %v415 = vsub.s32 0, %v414
        %v416 = vrot.slane %v410, %v415
        %v417 = vmul.f32 %v416, %v265
        %v418 = vlaneseq
        %v419 = vshrl.u32 %v418, 7
        %v420 = vsub.s32 1, %v419
        %v421 = vrot.slane %v410, %v420
        %v422 = vmul.f32 %v421, %v286
        %v423 = vadd.f32 %v417, %v422
        %vm424 = vcmp.eq.s32.totalorder %v266, 0
        %v425 = vsel %vm424, 1, 0
        %v426 = vlaneseq
        %v427 = vshrl.u32 %v426, 7
        %v428 = vsub.s32 0, %v427
        %v429 = vrot.slane %v425, %v428
        %vm430 = vcmp.eq.s32.totalorder %v429, 1
        %v431 = vsel %vm430, %v423, 0.0
        %v432 = vsel %vm268, %v431, 0.0
        %433 = vadd.xlane.f32.xlu0 %v432
        %v434 = vpop.xlane.xlu0 %433
        %vm435 = vcmp.eq.s32.totalorder %v266, 1
        %v436 = vsel %vm435, 1, 0
        %v437 = vlaneseq
        %v438 = vshrl.u32 %v437, 7
        %v439 = vsub.s32 0, %v438
        %v440 = vrot.slane %v436, %v439
        %vm441 = vcmp.eq.s32.totalorder %v440, 1
        %v442 = vsel %vm441, %v423, 0.0
        %v443 = vsel %vm268, %v442, 0.0
        %444 = vadd.xlane.f32.xlu0 %v443
        %v445 = vpop.xlane.xlu0 %444
        %vm446 = vcmask 7168
        %v447 = vsel %vm446, %v434, %v445
        %v448 = vadd.f32 %v447, 0.0
        %v449 = vld [vmem:[%s253] sm:$0x7]
        %v450 = vadd.f32 %v449, %v448
        %vm451 = vcmask 10240
        %452 = vst.msk [vmem:[%s253] sm:$0x7] %vm451, %v450
        %p453 = scmp.lt.s32.totalorder %s24, 1
        %s454 = scalar_select %p453, %s24, 1
        %s455 = smul.addr %s454, 4
        %s456 = scalar_lea.vmem %s3, %s455
        // Predicated region
        $region49: #{tpu_custom_call.1} parent=31 // pred_check
          %p457 = pneg %p127
        $region50: #{tpu_custom_call.1} parent=31 // pred_check_branch
          %459 = sbr.rel (%p457) target = $region52
        $region51: #{tpu_custom_call.1} parent=31 // pred_region
          _
        $region52: #{tpu_custom_call.1} parent=31 // pred_fallthru
          _
      $region32: #{tpu_custom_call.1} parent=5 // pred_fallthru
        _
      %p460 = scmp.le.s32.totalorder 2, %s15
      // Predicated region
      $region53: #{tpu_custom_call.1} parent=5 // pred_check
        %p461 = pneg %p460
      $region54: #{tpu_custom_call.1} parent=5 // pred_check_branch
        %463 = sbr.rel (%p461) target = $region56
      $region55: #{tpu_custom_call.1} parent=5 // pred_region
        %s464 = ssub.s32 %s15, 2
        // Predicated region
        $region57: #{tpu_custom_call.1} parent=55 // pred_check
          %p465 = pneg %p133
        $region58: #{tpu_custom_call.1} parent=55 // pred_check_branch
          %467 = sbr.rel (%p465) target = $region60
        $region59: #{tpu_custom_call.1} parent=55 // pred_region
          %p468 = scmp.lt.s32.totalorder %s26, 1
          %s469 = scalar_select %p468, %s26, 1
          %s470 = smul.addr %s469, 4
          %s471 = scalar_lea.vmem %s3, %s470
        $region60: #{tpu_custom_call.1} parent=55 // pred_fallthru
          _
      $region56: #{tpu_custom_call.1} parent=5 // pred_fallthru
        _
    $region6: #{tpu_custom_call.1} parent=1 // loop_footer
      %s19 = sadd.s32 1, %s15
    $region7: #{tpu_custom_call.1} parent=1 // loop_footer_branch
      %14 = sbr.rel target = $region3
    $region8: #{tpu_custom_call.1} parent=1 // loop_exit
      _
    %472 = vsyncpa [#allocation3], 1
    %s473 = scalar_lea.sflag [#allocation3], 1
    %474 = vsyncpa %s473, 1
    %475 = vsyncpa [#allocation5], 1
    %s476 = scalar_lea.sflag [#allocation5], 1
    %477 = vsyncpa %s476, 1

</llo_original>
